<compile_context>
chip_gen: v6e
topology: v6e:2x2x1
jax: 0.10.0
libtpu: 0.0.40
codegen_flags: <defaults>
</compile_context>

<pallas_src>
import jax
import jax.numpy as jnp
from jax.experimental import pallas as pl
from jax.experimental.pallas import tpu as pltpu


_LANE = 128
_TARGET_TILE_BYTES = 2 * 1024 * 1024   # ~2 MiB per buffer
_VMEM_LIMIT_BYTES = 32 * 1024 * 1024   # safe on v5e/v6e/v7x


def _copy_kernel(x_ref, o_ref):
    # Straight dense VMEM tile copy.
    o_ref[...] = x_ref[...]


def _sublane_multiple(dtype) -> int:
    itemsize = jnp.dtype(dtype).itemsize
    return {4: 8, 2: 16, 1: 32}.get(itemsize, 8)


def _choose_slab(total: int):
    """Pick (rows, cols) with rows*cols == total, cols a multiple of 128
    (capped at 16*128 = 2048), preferring rows >= 8 for sublane density."""
    if total % _LANE != 0:
        return None
    units = total // _LANE
    widest = None
    for f in range(min(16, units), 0, -1):
        if units % f == 0:
            if widest is None:
                widest = f
            if total // (_LANE * f) >= 8:
                widest = f
                break
    cols = _LANE * widest
    return total // cols, cols


def _choose_block_rows(rows: int, cols: int, dtype) -> int:
    """Block rows: multiple of the sublane packing, ~_TARGET_TILE_BYTES per
    buffer, preferring a value that divides `rows` evenly (no masked tail)."""
    sub = _sublane_multiple(dtype)
    itemsize = jnp.dtype(dtype).itemsize
    target = max(1, _TARGET_TILE_BYTES // (cols * itemsize))
    blk = max(sub, (target // sub) * sub)  # multiple of the sublane packing
    if blk >= rows:
        return rows  # full extent is always legal
    # Prefer an even divisor of rows near the target (avoids a masked tail
    # tile); fall back to the target-sized block otherwise (still correct).
    for cand in range(blk, sub - 1, -sub):
        if rows % cand == 0:
            return cand
    return blk


def flatten_pallas(x: jax.Array) -> jax.Array:
    """Pallas equivalent of the PyTorch Flatten.forward."""
    n, c, h, w = x.shape
    k = c * h * w
    total = n * k
    dtype = x.dtype

    slab = _choose_slab(total)
    if slab is not None:
        rows, cols = slab
        blk_r = _choose_block_rows(rows, cols, dtype)
        # Metadata-only collapse of the contiguous data into a dense slab.
        x2d = x.reshape(rows, cols)
        out = pl.pallas_call(
            _copy_kernel,
            out_shape=jax.ShapeDtypeStruct((rows, cols), dtype),
            grid_spec=pltpu.PrefetchScalarGridSpec(
                num_scalar_prefetch=0,
                grid=(pl.cdiv(rows, blk_r),),
                in_specs=[pl.BlockSpec((blk_r, cols), lambda i: (i, 0))],
                out_specs=pl.BlockSpec((blk_r, cols), lambda i: (i, 0)),
            ),
            compiler_params=pltpu.CompilerParams(
                dimension_semantics=("parallel",),
                vmem_limit_bytes=_VMEM_LIMIT_BYTES,
            ),
        )(x2d)
        return out.reshape(n, k)

    # Fallback (total not a multiple of 128): tile the (n, k) view directly.
    # Block dims are either full-extent or multiples of (8, 128), so the
    # (8, 128) BlockSpec rule is always satisfied; Pallas masks partial tiles.
    x2d = x.reshape(n, k)
    blk_n = n if n <= 256 else 256
    blk_k = k if k <= 2048 else 2048
    return pl.pallas_call(
        _copy_kernel,
        out_shape=jax.ShapeDtypeStruct((n, k), dtype),
        grid_spec=pltpu.PrefetchScalarGridSpec(
            num_scalar_prefetch=0,
            grid=(pl.cdiv(n, blk_n), pl.cdiv(k, blk_k)),
            in_specs=[pl.BlockSpec((blk_n, blk_k), lambda i, j: (i, j))],
            out_specs=pl.BlockSpec((blk_n, blk_k), lambda i, j: (i, j)),
        ),
        compiler_params=pltpu.CompilerParams(
            dimension_semantics=("parallel", "parallel"),
            vmem_limit_bytes=_VMEM_LIMIT_BYTES,
        ),
    )(x2d)


if __name__ == "__main__":
    key = jax.random.PRNGKey(0)

    # Main case: (batch, C, H, W) = (2, 4, 16, 16), f32.
    x = jax.random.normal(key, (2, 4, 16, 16), dtype=jnp.float32)
    out = flatten_pallas(x)
    jax.block_until_ready(out)
    ref = x.reshape(x.shape[0], x.shape[1] * x.shape[2] * x.shape[3])
    assert out.shape == (2, 4 * 16 * 16), out.shape
    assert out.dtype == x.dtype
    assert jnp.array_equal(out, ref), "mismatch vs reference flatten (main path)"

    # Odd-sized case to exercise the non-128-multiple fallback path.
    x2 = jax.random.normal(jax.random.PRNGKey(0), (2, 3, 5, 7), dtype=jnp.float32)
    out2 = flatten_pallas(x2)
    jax.block_until_ready(out2)
    ref2 = x2.reshape(2, 3 * 5 * 7)
    assert out2.shape == (2, 105), out2.shape
    assert jnp.array_equal(out2, ref2), "mismatch vs reference flatten (fallback)"

    print("KERNEL_OK")
</pallas_src>

<mosaic_0001>
module attributes {stable_mosaic.version = 11 : i64} {
  func.func @_copy_kernel(%arg0: i32, %arg1: memref<8x256xf32, #tpu.memory_space<vmem>>, %arg2: memref<8x256xf32, #tpu.memory_space<vmem>>) attributes {dimension_semantics = [#tpu.dimension_semantics<parallel>], iteration_bounds = array<i64: 1>, scalar_prefetch = 0 : i64, scratch_operands = 0 : i64, tpu.core_type = #tpu.core_type<tc>, window_params = [{transform_indices = @transform_0, window_bounds = array<i64: 8, 256>}, {transform_indices = @transform_1, window_bounds = array<i64: 8, 256>}]} {
    %c0 = arith.constant 0 : index
    %c0_0 = arith.constant 0 : index
    %0 = vector.load %arg1[%c0, %c0_0] : memref<8x256xf32, #tpu.memory_space<vmem>>, vector<8x256xf32>
    %c0_1 = arith.constant 0 : index
    %c0_2 = arith.constant 0 : index
    %1 = vector.load %arg2[%c0_1, %c0_2] : memref<8x256xf32, #tpu.memory_space<vmem>>, vector<8x256xf32>
    tpu.vector_store %arg2[%c0_1, %c0_2], %0 {strides = array<i32>} : memref<8x256xf32, #tpu.memory_space<vmem>>, vector<8x256xf32>,
    return
  }
  func.func @transform_0(%arg0: i32) -> (i32, i32) {
    %c0_i32 = arith.constant 0 : i32
    %c0_i32_0 = arith.constant 0 : i32
    return %arg0, %c0_i32 : i32, i32
  }
  func.func @transform_1(%arg0: i32) -> (i32, i32) {
    %c0_i32 = arith.constant 0 : i32
    %c0_i32_0 = arith.constant 0 : i32
    return %arg0, %c0_i32 : i32, i32
  }
}

</mosaic_0001>

<llo_original>
// kernel: tpu_custom_call.1
$region0: #{tpu_custom_call.1}
  #allocation0 [shape = 'u32[]', space=smem, size = 0x4, offset = 0x4, fixed_abs, tag = 'smem constant byte address 0x4 - core index']
  #allocation1 [shape = 'u32[144,128]{1,0:T(1,128)}', space=vmem, size = 0x12000, scoped, tag = 'internal scratch']
  %s0 = inlined_call_operand.hbm [shape: f32[8,256], index: 0, kind: input, shape index: {}]
  %s1 = inlined_call_operand.hbm [shape: f32[8,256], index: 1, kind: output, shape index: {}]
  %s2 = sld [smem:[#allocation0]]
  $region18: #{tpu_custom_call.1} parent=0
    _
  %s4 = ssub.s32 1, %s2
  %s5 = scalar_select 0, %s4, %s2
  $region1: #{tpu_custom_call.1} parent=0
    #allocation2 [shape = 'u8[8192]{0}', space=vmem, size = 0x2000, scoped, tag = 'input window, operand 0, single buffered']
    #allocation3 [shape = 's32[1]{0}', space=sflag, size = 0x4, scoped, tag = 'scoped memory for tpu_custom_call.1']
    #allocation4 [shape = 's32[1]{0}', space=sflag, size = 0x4, scoped, tag = 'scoped memory for tpu_custom_call.1']
    #allocation5 [shape = 'u8[8192]{0}', space=vmem, size = 0x2000, scoped, tag = 'output window, operand 0, single buffered']
    %6 = vsyncpa [#allocation3], 0
    %7 = vsyncpa [#allocation4], 0
    // Predicated region
    $region2: #{tpu_custom_call.1} parent=1 // pred_check
      _
    $region3: #{tpu_custom_call.1} parent=1 // pred_check_branch
      %9 = sbr.rel (0) target = $region5
    $region4: #{tpu_custom_call.1} parent=1 // pred_region
      %s11 = ssub.s32 256, 256
      %12 = vsyncadd [#allocation3], %s11
      %s14 = sshll.u32 [#allocation2], 4
      %s15 = int_to_ptr.vmem [resolvable:$true] %s14
      %17 = dma.hbm_to_vmem [thread:$0]  %s0, 256, %s15, [#allocation3]
    $region5: #{tpu_custom_call.1} parent=1 // pred_fallthru
      _
    // Predicated region
    $region6: #{tpu_custom_call.1} parent=1 // pred_check
      _
    $region7: #{tpu_custom_call.1} parent=1 // pred_check_branch
      %19 = sbr.rel (0) target = $region9
    $region8: #{tpu_custom_call.1} parent=1 // pred_region
      %20 = dma.done [#allocation3], 256
    $region9: #{tpu_custom_call.1} parent=1 // pred_fallthru
      _
    %v21 = vld [vmem:[#allocation2] sm:$0xff]
    %v22 = vld [vmem:[#allocation2 + $0x8] sm:$0xff]
    %23 = vst [vmem:[#allocation5] sm:$0xff] %v21
    %24 = vst [vmem:[#allocation5 + $0x8] sm:$0xff] %v22
    // Predicated region
    $region10: #{tpu_custom_call.1} parent=1 // pred_check
      _
    $region11: #{tpu_custom_call.1} parent=1 // pred_check_branch
      %26 = sbr.rel (0) target = $region13
    $region12: #{tpu_custom_call.1} parent=1 // pred_region
      %s28 = ssub.s32 256, 256
      %29 = vsyncadd [#allocation4], %s28
      %s31 = sshll.u32 [#allocation5], 4
      %s32 = int_to_ptr.vmem [resolvable:$true] %s31
      %34 = dma.vmem_to_hbm [thread:$0]  %s32, 256, %s1, [#allocation4]
    $region13: #{tpu_custom_call.1} parent=1 // pred_fallthru
      _
    // Predicated region
    $region14: #{tpu_custom_call.1} parent=1 // pred_check
      _
    $region15: #{tpu_custom_call.1} parent=1 // pred_check_branch
      %36 = sbr.rel (0) target = $region17
    $region16: #{tpu_custom_call.1} parent=1 // pred_region
      %37 = dma.done [#allocation4], 256
    $region17: #{tpu_custom_call.1} parent=1 // pred_fallthru
      _
    %38 = vsyncpa [#allocation3], 1
    %39 = vsyncpa [#allocation4], 1

</llo_original>
